<compile_context>
chip_gen: v5e
topology: v5e:2x2
jax: 0.10.0
libtpu: 0.0.40
codegen_flags: <defaults>
</compile_context>

<pallas_src>
import functools

import jax
import jax.numpy as jnp
from jax.experimental import pallas as pl
from jax.experimental.pallas import tpu as pltpu


def _conv3x3_relu_kernel(x_ref, w_ref, b_ref, o_ref, *, H, W, B):
    # x_ref: (B, 1, L)   flat zero-guarded images, L = H*W + 2*W + 2
    # w_ref: (Cout, 9)   conv weight, columns ordered t = kh*3 + kw
    # b_ref: (Cout, 1)   conv bias
    # o_ref: (B, Cout, H*W)  channel-major output, row-major over (h, w)
    HW = H * W

    # Per-column edge masks (computed once, reused for every tap / image).
    col = jax.lax.broadcasted_iota(jnp.int32, (1, HW), 1) % W
    left_edge = col == 0            # tap kw == 0 reads out of the row -> 0
    right_edge = col == (W - 1)     # tap kw == 2 reads out of the row -> 0

    w_mat = w_ref[...]              # (Cout, 9)
    b_vec = b_ref[...]              # (Cout, 1)

    for b in range(B):              # B is small & static (capped in wrapper)
        buf = x_ref[b]              # (1, L)
        rows = []
        for kh in range(3):
            for kw in range(3):
                off = kh * W + kw   # static offset into the guarded buffer
                row = buf[:, off:off + HW]          # (1, HW) contiguous
                if kw == 0:
                    row = jnp.where(left_edge, 0.0, row)
                elif kw == 2:
                    row = jnp.where(right_edge, 0.0, row)
                rows.append(row)
        p = jnp.concatenate(rows, axis=0)           # (9, HW), lanes dense

        y = jnp.dot(w_mat, p, preferred_element_type=jnp.float32)  # (Cout, HW)
        y = y + b_vec
        o_ref[b] = jnp.maximum(y, 0.0)


def _pick_batch_block(N, per_image_bytes, vmem_budget_bytes, max_unroll=8):
    """Largest divisor of N whose double-buffered block fits the budget."""
    b = max(1, min(N, max_unroll, vmem_budget_bytes // max(2 * per_image_bytes, 1)))
    if N >= 2:
        # Keep at least two grid steps so both v7x TensorCores are busy.
        b = max(1, min(b, N // 2))
    while N % b != 0:
        b -= 1
    return b


def vgg_forward(x_nchw, weight, bias):
    """x_nchw: [N, 1, H, W]; weight: [64, 1, 3, 3]; bias: [64] -> [N, 64, H, W]."""
    N, Cin, H, W = x_nchw.shape
    assert Cin == 1, "cfg=[64] VGG has a single input channel"
    Cout = weight.shape[0]
    HW = H * W
    L = HW + 2 * W + 2  # row-major pixels with a (W+1)-zero guard on each side

    # Glue (cheap: touches only the 1-channel input).
    x_flat = x_nchw.reshape(N, HW).astype(jnp.float32)
    x_flat = jnp.pad(x_flat, ((0, 0), (W + 1, W + 1)))        # (N, L)
    x_flat = x_flat.reshape(N, 1, L)
    w_mat = weight.reshape(Cout, 9).astype(jnp.float32)       # (Cout, 9)
    b_mat = bias.reshape(Cout, 1).astype(jnp.float32)         # (Cout, 1)

    per_image_bytes = (Cout * HW + L) * 4                     # f32 in + out
    block_b = _pick_batch_block(N, per_image_bytes,
                                vmem_budget_bytes=16 * 1024 * 1024)
    grid_n = N // block_b

    kernel = functools.partial(_conv3x3_relu_kernel, H=H, W=W, B=block_b)

    out_flat = pl.pallas_call(
        kernel,
        out_shape=jax.ShapeDtypeStruct((N, Cout, HW), jnp.float32),
        grid_spec=pltpu.PrefetchScalarGridSpec(
            num_scalar_prefetch=0,
            grid=(grid_n,),
            in_specs=[
                pl.BlockSpec((block_b, 1, L), lambda n: (n, 0, 0)),
                pl.BlockSpec((Cout, 9), lambda n: (0, 0)),
                pl.BlockSpec((Cout, 1), lambda n: (0, 0)),
            ],
            out_specs=pl.BlockSpec((block_b, Cout, HW), lambda n: (n, 0, 0)),
        ),
        compiler_params=pltpu.CompilerParams(
            dimension_semantics=("parallel",),
            vmem_limit_bytes=32 * 1024 * 1024),
    )(x_flat, w_mat, b_mat)

    # [N, Cout, H*W] -> NCHW [N, Cout, H, W]  (pure metadata reshape).
    return out_flat.reshape(N, Cout, H, W)


def _reference_forward(x_nchw, weight, bias):
    y = jax.lax.conv_general_dilated(
        x_nchw, weight,
        window_strides=(1, 1), padding=((1, 1), (1, 1)),
        dimension_numbers=("NCHW", "OIHW", "NCHW"))
    return jnp.maximum(y + bias.reshape(1, -1, 1, 1), 0.0)


if __name__ == "__main__":
    key = jax.random.PRNGKey(0)
    k_x, k_w, k_b = jax.random.split(key, 3)

    N, Cin, H, W = 2, 1, 16, 16
    Cout, K = 64, 3

    x = jax.random.normal(k_x, (N, Cin, H, W), dtype=jnp.float32)

    # Deterministic kaiming-uniform-like init (Conv2d(1, 64, 3, padding=1)).
    fan_in = Cin * K * K
    bound_w = (6.0 / fan_in) ** 0.5
    bound_b = 1.0 / fan_in ** 0.5
    weight = jax.random.uniform(k_w, (Cout, Cin, K, K), jnp.float32,
                                minval=-bound_w, maxval=bound_w)
    bias = jax.random.uniform(k_b, (Cout,), jnp.float32,
                              minval=-bound_b, maxval=bound_b)

    out = vgg_forward(x, weight, bias)
    out = jax.block_until_ready(out)

    ref = _reference_forward(x, weight, bias)
    assert out.shape == (N, Cout, H, W), out.shape
    assert jnp.allclose(out, ref, atol=1e-4, rtol=1e-4), "mismatch vs reference conv"

    print("KERNEL_OK")
</pallas_src>

<mosaic_0001>
module attributes {stable_mosaic.version = 11 : i64} {
  func.func @_conv3x3_relu_kernel(%arg0: i32, %arg1: memref<1x1x290xf32, #tpu.memory_space<vmem>>, %arg2: memref<64x9xf32, #tpu.memory_space<vmem>>, %arg3: memref<64x1xf32, #tpu.memory_space<vmem>>, %arg4: memref<1x64x256xf32, #tpu.memory_space<vmem>>) attributes {dimension_semantics = [#tpu.dimension_semantics<parallel>], iteration_bounds = array<i64: 2>, scalar_prefetch = 0 : i64, scratch_operands = 0 : i64, tpu.core_type = #tpu.core_type<tc>, window_params = [{transform_indices = @transform_0, window_bounds = array<i64: 1, 1, 290>}, {pipeline_mode = #tpu.pipeline_mode<synchronous>, transform_indices = @transform_1, window_bounds = array<i64: 64, 9>}, {pipeline_mode = #tpu.pipeline_mode<synchronous>, transform_indices = @transform_2, window_bounds = array<i64: 64, 1>}, {transform_indices = @transform_3, window_bounds = array<i64: 1, 64, 256>}]} {
    %0 = tpu.iota {dimensions = array<i32: 1>} : vector<1x256xi32>
    %c16_i32 = arith.constant 16 : i32
    %c0_i32 = arith.constant 0 : i32
    %1 = arith.cmpi eq, %c16_i32, %c0_i32 : i32
    %c1_i32 = arith.constant 1 : i32
    %2 = arith.select %1, %c1_i32, %c16_i32 : i32
    %3 = vector.broadcast %2 : i32 to vector<1x256xi32>
    %4 = arith.remsi %0, %3 : vector<1x256xi32>
    %c0_i32_0 = arith.constant 0 : i32
    %5 = vector.broadcast %c0_i32_0 : i32 to vector<1x256xi32>
    %6 = arith.cmpi ne, %4, %5 : vector<1x256xi32>
    %c0_i32_1 = arith.constant 0 : i32
    %7 = vector.broadcast %c0_i32_1 : i32 to vector<1x256xi32>
    %8 = arith.cmpi slt, %4, %7 : vector<1x256xi32>
    %c0_i32_2 = arith.constant 0 : i32
    %9 = arith.cmpi slt, %2, %c0_i32_2 : i32
    %10 = vector.broadcast %9 : i1 to vector<1x256xi1>
    %11 = vector.broadcast %10 : vector<1x256xi1> to vector<1x256xi1>
    %12 = arith.xori %8, %11 : vector<1x256xi1>
    %13 = arith.andi %12, %6 : vector<1x256xi1>
    %14 = vector.broadcast %2 : i32 to vector<1x256xi32>
    %15 = arith.addi %4, %14 : vector<1x256xi32>
    %16 = arith.select %13, %15, %4 : vector<1x256xi1>, vector<1x256xi32>
    %c0_i32_3 = arith.constant 0 : i32
    %17 = vector.broadcast %c0_i32_3 : i32 to vector<1x256xi32>
    %18 = arith.cmpi eq, %16, %17 : vector<1x256xi32>
    %c15_i32 = arith.constant 15 : i32
    %19 = vector.broadcast %c15_i32 : i32 to vector<1x256xi32>
    %20 = arith.cmpi eq, %16, %19 : vector<1x256xi32>
    %c0 = arith.constant 0 : index
    %c0_4 = arith.constant 0 : index
    %21 = vector.load %arg2[%c0, %c0_4] : memref<64x9xf32, #tpu.memory_space<vmem>>, vector<64x9xf32>
    %c0_5 = arith.constant 0 : index
    %c0_6 = arith.constant 0 : index
    %22 = vector.load %arg3[%c0_5, %c0_6] : memref<64x1xf32, #tpu.memory_space<vmem>>, vector<64x1xf32>
    %c0_7 = arith.constant 0 : index
    %c0_8 = arith.constant 0 : index
    %c0_9 = arith.constant 0 : index
    %23 = vector.load %arg1[%c0_7, %c0_8, %c0_9] : memref<1x1x290xf32, #tpu.memory_space<vmem>>, vector<1x1x290xf32>
    %24 = vector.shape_cast %23 : vector<1x1x290xf32> to vector<1x290xf32>
    %25 = vector.extract_strided_slice %24 {offsets = [0, 0], sizes = [1, 256], strides = [1, 1]} : vector<1x290xf32> to vector<1x256xf32>
    %cst = arith.constant 0.000000e+00 : f32
    %26 = vector.broadcast %cst : f32 to vector<1x256xf32>
    %27 = arith.select %18, %26, %25 : vector<1x256xi1>, vector<1x256xf32>
    %28 = vector.extract_strided_slice %24 {offsets = [0, 1], sizes = [1, 256], strides = [1, 1]} : vector<1x290xf32> to vector<1x256xf32>
    %29 = vector.extract_strided_slice %24 {offsets = [0, 2], sizes = [1, 256], strides = [1, 1]} : vector<1x290xf32> to vector<1x256xf32>
    %cst_10 = arith.constant 0.000000e+00 : f32
    %30 = vector.broadcast %cst_10 : f32 to vector<1x256xf32>
    %31 = arith.select %20, %30, %29 : vector<1x256xi1>, vector<1x256xf32>
    %32 = vector.extract_strided_slice %24 {offsets = [0, 16], sizes = [1, 256], strides = [1, 1]} : vector<1x290xf32> to vector<1x256xf32>
    %cst_11 = arith.constant 0.000000e+00 : f32
    %33 = vector.broadcast %cst_11 : f32 to vector<1x256xf32>
    %34 = arith.select %18, %33, %32 : vector<1x256xi1>, vector<1x256xf32>
    %35 = vector.extract_strided_slice %24 {offsets = [0, 17], sizes = [1, 256], strides = [1, 1]} : vector<1x290xf32> to vector<1x256xf32>
    %36 = vector.extract_strided_slice %24 {offsets = [0, 18], sizes = [1, 256], strides = [1, 1]} : vector<1x290xf32> to vector<1x256xf32>
    %cst_12 = arith.constant 0.000000e+00 : f32
    %37 = vector.broadcast %cst_12 : f32 to vector<1x256xf32>
    %38 = arith.select %20, %37, %36 : vector<1x256xi1>, vector<1x256xf32>
    %39 = vector.extract_strided_slice %24 {offsets = [0, 32], sizes = [1, 256], strides = [1, 1]} : vector<1x290xf32> to vector<1x256xf32>
    %cst_13 = arith.constant 0.000000e+00 : f32
    %40 = vector.broadcast %cst_13 : f32 to vector<1x256xf32>
    %41 = arith.select %18, %40, %39 : vector<1x256xi1>, vector<1x256xf32>
    %42 = vector.extract_strided_slice %24 {offsets = [0, 33], sizes = [1, 256], strides = [1, 1]} : vector<1x290xf32> to vector<1x256xf32>
    %43 = vector.extract_strided_slice %24 {offsets = [0, 34], sizes = [1, 256], strides = [1, 1]} : vector<1x290xf32> to vector<1x256xf32>
    %cst_14 = arith.constant 0.000000e+00 : f32
    %44 = vector.broadcast %cst_14 : f32 to vector<1x256xf32>
    %45 = arith.select %20, %44, %43 : vector<1x256xi1>, vector<1x256xf32>
    %46 = tpu.concatenate %27, %28, %31, %34, %35, %38, %41, %42, %45 in 0 : vector<1x256xf32>, vector<1x256xf32>, vector<1x256xf32>, vector<1x256xf32>, vector<1x256xf32>, vector<1x256xf32>, vector<1x256xf32>, vector<1x256xf32>, vector<1x256xf32> -> vector<9x256xf32>
    %cst_15 = arith.constant dense<0.000000e+00> : vector<64x256xf32>
    %47 = tpu.matmul %21, %46, %cst_15 {dimension_numbers = #tpu.dot_dimension_numbers<[1], [0], [0], [1], [0, 0, 1, 1], [], []>} : vector<64x9xf32>, vector<9x256xf32>, vector<64x256xf32> -> vector<64x256xf32>
    %48 = vector.broadcast %22 : vector<64x1xf32> to vector<64x256xf32>
    %49 = arith.addf %47, %48 : vector<64x256xf32>
    %cst_16 = arith.constant 0.000000e+00 : f32
    %50 = vector.broadcast %cst_16 : f32 to vector<64x256xf32>
    %51 = arith.maximumf %49, %50 : vector<64x256xf32>
    %c0_17 = arith.constant 0 : index
    %c0_18 = arith.constant 0 : index
    %c0_19 = arith.constant 0 : index
    %52 = vector.load %arg4[%c0_17, %c0_18, %c0_19] : memref<1x64x256xf32, #tpu.memory_space<vmem>>, vector<1x64x256xf32>
    %53 = vector.shape_cast %52 : vector<1x64x256xf32> to vector<64x256xf32>
    %54 = vector.shape_cast %51 : vector<64x256xf32> to vector<1x64x256xf32>
    tpu.vector_store %arg4[%c0_17, %c0_18, %c0_19], %54 {strides = array<i32>} : memref<1x64x256xf32, #tpu.memory_space<vmem>>, vector<1x64x256xf32>,
    return
  }
  func.func @transform_0(%arg0: i32) -> (i32, i32, i32) {
    %c0_i32 = arith.constant 0 : i32
    %c0_i32_0 = arith.constant 0 : i32
    %c0_i32_1 = arith.constant 0 : i32
    return %arg0, %c0_i32, %c0_i32_0 : i32, i32, i32
  }
  func.func @transform_1(%arg0: i32) -> (i32, i32) {
    %c0_i32 = arith.constant 0 : i32
    %c0_i32_0 = arith.constant 0 : i32
    %c0_i32_1 = arith.constant 0 : i32
    return %c0_i32, %c0_i32_0 : i32, i32
  }
  func.func @transform_2(%arg0: i32) -> (i32, i32) {
    %c0_i32 = arith.constant 0 : i32
    %c0_i32_0 = arith.constant 0 : i32
    %c0_i32_1 = arith.constant 0 : i32
    return %c0_i32, %c0_i32_0 : i32, i32
  }
  func.func @transform_3(%arg0: i32) -> (i32, i32, i32) {
    %c0_i32 = arith.constant 0 : i32
    %c0_i32_0 = arith.constant 0 : i32
    %c0_i32_1 = arith.constant 0 : i32
    return %arg0, %c0_i32, %c0_i32_0 : i32, i32, i32
  }
}

</mosaic_0001>

<llo_original>
// kernel: tpu_custom_call.1
$region0: #{tpu_custom_call.1}
  #allocation0 [shape = 'u32[]', space=smem, size = 0x4, offset = 0x4, fixed_abs, tag = 'smem constant byte address 0x4 - core index']
  #allocation1 [shape = 'u32[72,128]{1,0:T(1,128)}', space=vmem, size = 0x9000, scoped, tag = 'internal scratch']
  %s0 = inlined_call_operand.vmem [shape: f32[2,1,290], index: 0, kind: input, shape index: {}]
  %s1 = inlined_call_operand.vmem [shape: f32[64,9], index: 1, kind: input, shape index: {}]
  %s2 = inlined_call_operand.vmem [shape: f32[64,1], index: 2, kind: input, shape index: {}]
  %s3 = inlined_call_operand.hbm [shape: f32[2,64,256], index: 3, kind: output, shape index: {}]
  %s4 = sld [smem:[#allocation0]]
  $region45: #{tpu_custom_call.1} parent=0
    _
  %s6 = ssub.s32 1, %s4
  %s7 = scalar_select 0, %s6, %s4
  $region1: #{tpu_custom_call.1} parent=0
    #allocation2 [shape = 'u8[131072]{0}', space=vmem, size = 0x20000, scoped, tag = 'output window, operand 0']
    #allocation3 [shape = 's32[2]{0}', space=sflag, size = 0x8, scoped, tag = 'scoped memory for tpu_custom_call.1']
    %8 = vsyncpa [#allocation3], 0
    %s9 = scalar_lea.sflag [#allocation3], 1
    %10 = vsyncpa %s9, 0
    loop: start=0, step=1, limit=4
    $region2: #{tpu_custom_call.1} parent=1 // loop_pre_header
      _
    $region3: #{tpu_custom_call.1} parent=1 // loop_header
      %s12 = sphi 0, %s16
      %p13 = scmp.ge.s32.totalorder %s12, 4
      %s22 = sphi 0, %s24
      %s25 = sphi 0, %s22
      %s26 = sphi 0, %s25
      %s42 = sphi 0, %s26
      %s46 = sphi 0, %s46
      %s48 = sphi 0, %s46
      %s49 = sphi 0, %s48
      %s63 = sphi 0, %s49
      %s67 = sphi 0, %s67
      %s69 = sphi 0, %s67
      %s70 = sphi 0, %s69
      %s84 = sphi 0, %s70
      %s90 = sphi 0, %s92
      %s93 = sphi 0, %s90
      %s94 = sphi 0, %s93
      %s110 = sphi 0, %s94
    $region4: #{tpu_custom_call.1} parent=1 // loop_header_branch
      %15 = sbr.rel (%p13) target = $region8
    $region5: #{tpu_custom_call.1} parent=1 // loop_body
      %s17 = ssub.s32 %s12, 1
      %s18 = ssub.s32 %s12, 2
      %s19 = sadd.s32 %s12, 1
      %s20 = ssub.s32 %s12, %s19
      %p21 = scmp.eq.s32.totalorder %s20, 0
      %s23 = sadd.s32 %s22, 1
      %s24 = scalar_select %p21, %s22, %s23
      %p27 = pneg %p21
      %p28 = scmp.eq.s32.totalorder %s12, 1
      %p29 = por %p27, %p28
      %p30 = scmp.ne.s32.totalorder %s22, %s25
      %p31 = scmp.eq.s32.totalorder %s12, 0
      %p32 = por %p30, %p31
      %p33 = scmp.ne.s32.totalorder %s22, %s25
      %p34 = scmp.eq.s32.totalorder %s17, 1
      %p35 = por %p33, %p34
      %p36 = scmp.ne.s32.totalorder %s25, %s26
      %p37 = scmp.eq.s32.totalorder %s17, 0
      %p38 = por %p36, %p37
      %p39 = scmp.ne.s32.totalorder %s25, %s26
      %p40 = scmp.eq.s32.totalorder %s18, 1
      %p41 = por %p39, %p40
      %p43 = scmp.ne.s32.totalorder %s26, %s42
      %p44 = scmp.eq.s32.totalorder %s18, 0
      %p45 = por %p43, %p44
      %s47 = sadd.s32 %s46, 1
      %p50 = scmp.eq.s32.totalorder %s12, 1
      %p51 = scmp.ne.s32.totalorder %s46, %s48
      %p52 = scmp.eq.s32.totalorder %s12, 0
      %p53 = por %p51, %p52
      %p54 = scmp.ne.s32.totalorder %s46, %s48
      %p55 = scmp.eq.s32.totalorder %s17, 1
      %p56 = por %p54, %p55
      %p57 = scmp.ne.s32.totalorder %s48, %s49
      %p58 = scmp.eq.s32.totalorder %s17, 0
      %p59 = por %p57, %p58
      %p60 = scmp.ne.s32.totalorder %s48, %s49
      %p61 = scmp.eq.s32.totalorder %s18, 1
      %p62 = por %p60, %p61
      %p64 = scmp.ne.s32.totalorder %s49, %s63
      %p65 = scmp.eq.s32.totalorder %s18, 0
      %p66 = por %p64, %p65
      %s68 = sadd.s32 %s67, 1
      %p71 = scmp.eq.s32.totalorder %s12, 1
      %p72 = scmp.ne.s32.totalorder %s67, %s69
      %p73 = scmp.eq.s32.totalorder %s12, 0
      %p74 = por %p72, %p73
      %p75 = scmp.ne.s32.totalorder %s67, %s69
      %p76 = scmp.eq.s32.totalorder %s17, 1
      %p77 = por %p75, %p76
      %p78 = scmp.ne.s32.totalorder %s69, %s70
      %p79 = scmp.eq.s32.totalorder %s17, 0
      %p80 = por %p78, %p79
      %p81 = scmp.ne.s32.totalorder %s69, %s70
      %p82 = scmp.eq.s32.totalorder %s18, 1
      %p83 = por %p81, %p82
      %p85 = scmp.ne.s32.totalorder %s70, %s84
      %p86 = scmp.eq.s32.totalorder %s18, 0
      %p87 = por %p85, %p86
      %s88 = ssub.s32 %s12, %s19
      %p89 = scmp.eq.s32.totalorder %s88, 0
      %s91 = sadd.s32 %s90, 1
      %s92 = scalar_select %p89, %s90, %s91
      %p95 = pneg %p89
      %p96 = scmp.eq.s32.totalorder %s12, 1
      %p97 = por %p95, %p96
      %p98 = scmp.ne.s32.totalorder %s90, %s93
      %p99 = scmp.eq.s32.totalorder %s12, 0
      %p100 = por %p98, %p99
      %p101 = scmp.ne.s32.totalorder %s90, %s93
      %p102 = scmp.eq.s32.totalorder %s17, 1
      %p103 = por %p101, %p102
      %p104 = scmp.ne.s32.totalorder %s93, %s94
      %p105 = scmp.eq.s32.totalorder %s17, 0
      %p106 = por %p104, %p105
      %p107 = scmp.ne.s32.totalorder %s93, %s94
      %p108 = scmp.eq.s32.totalorder %s18, 1
      %p109 = por %p107, %p108
      %p111 = scmp.ne.s32.totalorder %s94, %s110
      %p112 = scmp.eq.s32.totalorder %s18, 0
      %p113 = por %p111, %p112
      %p114 = scmp.le.s32.totalorder 1, %s12
      %p115 = scmp.lt.s32.totalorder %s12, 3
      %p116 = pnand %p114, %p115
      %p117 = pneg %p116
      // Predicated region
      $region9: #{tpu_custom_call.1} parent=5 // pred_check
        _
      $region10: #{tpu_custom_call.1} parent=5 // pred_check_branch
        %119 = sbr.rel (%p116) target = $region12
      $region11: #{tpu_custom_call.1} parent=5 // pred_region
        %s120 = ssub.s32 %s12, 1
        // Predicated region
        $region13: #{tpu_custom_call.1} parent=11 // pred_check
          %p121 = pneg %p59
        $region14: #{tpu_custom_call.1} parent=11 // pred_check_branch
          %123 = sbr.rel (%p121) target = $region16
        $region15: #{tpu_custom_call.1} parent=11 // pred_region
          _
        $region16: #{tpu_custom_call.1} parent=11 // pred_fallthru
          _
        // Predicated region
        $region17: #{tpu_custom_call.1} parent=11 // pred_check
          %p124 = pneg %p80
        $region18: #{tpu_custom_call.1} parent=11 // pred_check_branch
          %126 = sbr.rel (%p124) target = $region20
        $region19: #{tpu_custom_call.1} parent=11 // pred_region
          _
        $region20: #{tpu_custom_call.1} parent=11 // pred_fallthru
          _
      $region12: #{tpu_custom_call.1} parent=5 // pred_fallthru
        _
      %p127 = scmp.lt.s32.totalorder %s12, 2
      // Predicated region
      $region21: #{tpu_custom_call.1} parent=5 // pred_check
        %p128 = pneg %p127
      $region22: #{tpu_custom_call.1} parent=5 // pred_check_branch
        %130 = sbr.rel (%p128) target = $region24
      $region23: #{tpu_custom_call.1} parent=5 // pred_region
        // Predicated region
        $region25: #{tpu_custom_call.1} parent=23 // pred_check
          %p131 = pneg %p32
        $region26: #{tpu_custom_call.1} parent=23 // pred_check_branch
          %133 = sbr.rel (%p131) target = $region28
        $region27: #{tpu_custom_call.1} parent=23 // pred_region
          %p134 = scmp.lt.s32.totalorder %s12, 1
          %s135 = scalar_select %p134, %s12, 1
          %s136 = smul.addr %s135, 3
          %s137 = scalar_lea.vmem %s0, %s136
        $region28: #{tpu_custom_call.1} parent=23 // pred_fallthru
          _
      $region24: #{tpu_custom_call.1} parent=5 // pred_fallthru
        _
      %p138 = scmp.le.s32.totalorder 1, %s12
      %p139 = scmp.lt.s32.totalorder %s12, 3
      %p140 = pnand %p138, %p139
      %p141 = pneg %p140
      // Predicated region
      $region29: #{tpu_custom_call.1} parent=5 // pred_check
        _
      $region30: #{tpu_custom_call.1} parent=5 // pred_check_branch
        %143 = sbr.rel (%p140) target = $region32
      $region31: #{tpu_custom_call.1} parent=5 // pred_region
        %s144 = ssub.s32 %s12, 1
        %p145 = scmp.lt.s32.totalorder %s17, 1
        %s146 = scalar_select %p145, %s17, 1
        %s147 = smul.addr %s146, 3
        %s148 = scalar_lea.vmem %s0, %s147
        %p149 = pneg %p38
        %p150 = pneg %p35
        %p151 = pneg %p59
        %p152 = pneg %p56
        %p153 = pneg %p80
        %p154 = pneg %p77
        %p155 = pneg %p106
        %p156 = pneg %p103
        %s157 = sand.u32 %s93, 1
        %s158 = scalar_lea.sflag [#allocation3], %s157
        %s159 = sand.u32 %s93, 1
        %s160 = smul.addr %s159, 128
        %s161 = scalar_lea.vmem [#allocation2], %s160
        %p162 = scmp.lt.s32.totalorder %s17, 1
        %s163 = scalar_select %p162, %s17, 1
        %s164 = smul.addr %s163, 3
        %s165 = scalar_lea.vmem %s0, %s164
        %v166 = vlaneseq
        %v167 = vand.u32 %v166, 127
        %v168 = vadd.s32 %v167, 128
        %vm169 = vcmp.lt.s32.totalorder %v167, 0
        %v170 = vsub.s32 0, %v167
        %v171 = vsel %vm169, %v170, %v167
        %v172 = vshrl.u32 %v171, 4
        %v173 = vand.u32 %v171, 15
        %v174 = vsub.s32 0, %v173
        %v175 = vsel %vm169, %v174, %v173
        %vm176 = vcmp.lt.s32.totalorder %v168, 0
        %v177 = vsub.s32 0, %v168
        %v178 = vsel %vm176, %v177, %v168
        %v179 = vshrl.u32 %v178, 4
        %v180 = vand.u32 %v178, 15
        %v181 = vsub.s32 0, %v180
        %v182 = vsel %vm176, %v181, %v180
        %vm183 = vcmp.ne.s32.totalorder %v175, 0
        %vm184 = vcmp.ne.s32.totalorder %v182, 0
        %vm185 = vcmp.lt.s32.totalorder %v175, 0
        %vm186 = vcmp.lt.s32.totalorder %v182, 0
        %vm187 = vmand %vm185, %vm183
        %vm188 = vmand %vm186, %vm184
        %v189 = vadd.s32 %v175, 16
        %v190 = vadd.s32 %v182, 16
        %v191 = vsel %vm187, %v189, %v175
        %v192 = vsel %vm188, %v190, %v182
        %vm193 = vcmp.eq.s32.totalorder %v191, 0
        %vm194 = vcmp.eq.s32.totalorder %v192, 0
        %vm195 = vcmp.eq.s32.totalorder %v191, 15
        %vm196 = vcmp.eq.s32.totalorder %v192, 15
        %v197 = vld [vmem:[%s1] sm:$0xff]
        %v198 = vld [vmem:[%s1 + $0x8] sm:$0xff]
        %v199 = vld [vmem:[%s1 + $0x10] sm:$0xff]
        %v200 = vld [vmem:[%s1 + $0x18] sm:$0xff]
        %v201 = vld [vmem:[%s1 + $0x20] sm:$0xff]
        %v202 = vld [vmem:[%s1 + $0x28] sm:$0xff]
        %v203 = vld [vmem:[%s1 + $0x30] sm:$0xff]
        %v204 = vld [vmem:[%s1 + $0x38] sm:$0xff]
        %v205 = vld [vmem:[%s2] sm:$0xff]
        %v206 = vld [vmem:[%s2 + $0x8] sm:$0xff]
        %v207 = vld [vmem:[%s2 + $0x10] sm:$0xff]
        %v208 = vld [vmem:[%s2 + $0x18] sm:$0xff]
        %v209 = vld [vmem:[%s2 + $0x20] sm:$0xff]
        %v210 = vld [vmem:[%s2 + $0x28] sm:$0xff]
        %v211 = vld [vmem:[%s2 + $0x30] sm:$0xff]
        %v212 = vld [vmem:[%s2 + $0x38] sm:$0xff]
        %v213 = vld [vmem:[%s165] sm:$0x7]
        %v215 = vperm.slane %v213, 0
        %v216 = vperm.slane %v213, 1
        %v219 = vsel %vm193, 0.0, %v215
        %v220 = vsel %vm194, 0.0, %v216
        %v221 = vperm.slane %v213, 2
        %222 = vrot.lane.b32.xlu0 %v215, 126
        %v223 = vpop.permute.xlu0 %222
        %224 = vrot.lane.b32.xlu0 %v216, 126
        %v225 = vpop.permute.xlu0 %224
        %226 = vrot.lane.b32.xlu0 %v221, 126
        %v227 = vpop.permute.xlu0 %226
        %vm228 = vcmask 1031168
        %v229 = vsel %vm228, %v223, %v225
        %v230 = vsel %vm228, %v225, %v227
        %v233 = vsel %vm195, 0.0, %v229
        %v234 = vsel %vm196, 0.0, %v230
        %235 = vrot.lane.b32.xlu0 %v215, 112
        %v236 = vpop.permute.xlu0 %235
        %237 = vrot.lane.b32.xlu0 %v216, 112
        %v238 = vpop.permute.xlu0 %237
        %239 = vrot.lane.b32.xlu0 %v221, 112
        %v240 = vpop.permute.xlu0 %239
        %vm241 = vcmask 916480
        %v242 = vsel %vm241, %v236, %v238
        %v243 = vsel %vm241, %v238, %v240
        %v246 = vsel %vm193, 0.0, %v242
        %v247 = vsel %vm194, 0.0, %v243
        %248 = vrot.lane.b32.xlu0 %v215, 110
        %v249 = vpop.permute.xlu0 %248
        %250 = vrot.lane.b32.xlu0 %v216, 110
        %v251 = vpop.permute.xlu0 %250
        %252 = vrot.lane.b32.xlu0 %v221, 110
        %v253 = vpop.permute.xlu0 %252
        %vm254 = vcmask 900096
        %v255 = vsel %vm254, %v249, %v251
        %v256 = vsel %vm254, %v251, %v253
        %v259 = vsel %vm195, 0.0, %v255
        %v260 = vsel %vm196, 0.0, %v256
        %261 = vrot.lane.b32.xlu0 %v215, 96
        %v262 = vpop.permute.xlu0 %261
        %263 = vrot.lane.b32.xlu0 %v216, 96
        %v264 = vpop.permute.xlu0 %263
        %265 = vrot.lane.b32.xlu0 %v221, 96
        %v266 = vpop.permute.xlu0 %265
        %vm267 = vcmask 785408
        %v268 = vsel %vm267, %v262, %v264
        %v269 = vsel %vm267, %v264, %v266
        %v272 = vsel %vm193, 0.0, %v268
        %v273 = vsel %vm194, 0.0, %v269
        %274 = vrot.lane.b32.xlu0 %v215, 94
        %v275 = vpop.permute.xlu0 %274
        %276 = vrot.lane.b32.xlu0 %v216, 94
        %v277 = vpop.permute.xlu0 %276
        %278 = vrot.lane.b32.xlu0 %v221, 94
        %v279 = vpop.permute.xlu0 %278
        %vm280 = vcmask 769024
        %v281 = vsel %vm280, %v275, %v277
        %v282 = vsel %vm280, %v277, %v279
        %v285 = vsel %vm195, 0.0, %v281
        %v286 = vsel %vm196, 0.0, %v282
        %287 = vrot.lane.b32.xlu0 %v215, 127
        %v288 = vpop.permute.xlu0 %287
        %289 = vrot.lane.b32.xlu0 %v216, 127
        %v290 = vpop.permute.xlu0 %289
        %291 = vrot.lane.b32.xlu0 %v221, 127
        %v292 = vpop.permute.xlu0 %291
        %vm293 = vcmask 1039360
        %v294 = vsel %vm293, %v288, %v290
        %v295 = vsel %vm293, %v290, %v292
        %v300 = vrot.slane %v233, 6
        %v301 = vrot.slane %v234, 6
        %v306 = vrot.slane %v246, 5
        %v307 = vrot.slane %v247, 5
        %310 = vrot.lane.b32.xlu0 %v215, 111
        %v311 = vpop.permute.xlu0 %310
        %312 = vrot.lane.b32.xlu0 %v216, 111
        %v313 = vpop.permute.xlu0 %312
        %314 = vrot.lane.b32.xlu0 %v221, 111
        %v315 = vpop.permute.xlu0 %314
        %vm316 = vcmask 908288
        %v317 = vsel %vm316, %v311, %v313
        %v318 = vsel %vm316, %v313, %v315
        %v323 = vrot.slane %v259, 3
        %v324 = vrot.slane %v260, 3
        %v329 = vrot.slane %v272, 2
        %v330 = vrot.slane %v273, 2
        %333 = vrot.lane.b32.xlu0 %v215, 95
        %v334 = vpop.permute.xlu0 %333
        %335 = vrot.lane.b32.xlu0 %v216, 95
        %v336 = vpop.permute.xlu0 %335
        %337 = vrot.lane.b32.xlu0 %v221, 95
        %v338 = vpop.permute.xlu0 %337
        %vm339 = vcmask 777216
        %v340 = vsel %vm339, %v334, %v336
        %v341 = vsel %vm339, %v336, %v338
        %vm344 = vcmask 1040384
        %v345 = vsel %vm344, %v219, %v294
        %v346 = vsel %vm344, %v220, %v295
        %vm347 = vcmask 1041408
        %v348 = vsel %vm347, %v345, %v300
        %v349 = vsel %vm347, %v346, %v301
        %vm350 = vcmask 1042432
        %v351 = vsel %vm350, %v348, %v306
        %v352 = vsel %vm350, %v349, %v307
        %vm353 = vcmask 1043456
        %v354 = vsel %vm353, %v351, %v317
        %v355 = vsel %vm353, %v352, %v318
        %vm356 = vcmask 1044480
        %v357 = vsel %vm356, %v354, %v323
        %v358 = vsel %vm356, %v355, %v324
        %vm359 = vcmask 1045504
        %v360 = vsel %vm359, %v357, %v329
        %v361 = vsel %vm359, %v358, %v330
        %vm362 = vcmask 1046528
        %v363 = vsel %vm362, %v360, %v340
        %v364 = vsel %vm362, %v361, %v341
        %366 = vset.pattern.permute.xlu0 0
        %367 = vperm.xlu0 %366, %v205
        %v368 = vpop.permute.xlu0 %367
        %371 = vset.pattern.permute.xlu0 0
        %372 = vperm.xlu0 %371, %v206
        %v373 = vpop.permute.xlu0 %372
        %376 = vset.pattern.permute.xlu0 0
        %377 = vperm.xlu0 %376, %v207
        %v378 = vpop.permute.xlu0 %377
        %381 = vset.pattern.permute.xlu0 0
        %382 = vperm.xlu0 %381, %v208
        %v383 = vpop.permute.xlu0 %382
        %386 = vset.pattern.permute.xlu0 0
        %387 = vperm.xlu0 %386, %v209
        %v388 = vpop.permute.xlu0 %387
        %391 = vset.pattern.permute.xlu0 0
        %392 = vperm.xlu0 %391, %v210
        %v393 = vpop.permute.xlu0 %392
        %396 = vset.pattern.permute.xlu0 0
        %397 = vperm.xlu0 %396, %v211
        %v398 = vpop.permute.xlu0 %397
        %401 = vset.pattern.permute.xlu0 0
        %402 = vperm.xlu0 %401, %v212
        %v403 = vpop.permute.xlu0 %402
        %vm405 = vcmask 72704
        %v407 = vsel %vm405, %v197, 0
        %v410 = vsel %vm405, %v198, 0
        %v413 = vsel %vm405, %v199, 0
        %v416 = vsel %vm405, %v200, 0
        %v419 = vsel %vm405, %v201, 0
        %v422 = vsel %vm405, %v202, 0
        %v425 = vsel %vm405, %v203, 0
        %v428 = vsel %vm405, %v204, 0
        %v431 = vsel %vm344, %v285, 0
        %v434 = vsel %vm344, %v286, 0
        %436 = vmatpush.msra.mxu0 0.0
        %437 = vmatpush.msra.mxu0 0.0
        %438 = vmatpush.msra.mxu0 0.0
        %439 = vmatpush.msra.mxu0 0.0
        %440 = vmatpush.msra.mxu0 0.0
        %441 = vmatpush.msra.mxu0 0.0
        %442 = vmatpush.msra.mxu0 0.0
        %443 = vmatpush.msra.mxu0 0.0
        %444 = vmatpush.msra.mxu0 0.0
        %445 = vmatpush.msra.mxu0 0.0
        %446 = vmatpush.msra.mxu0 0.0
        %447 = vmatpush.msra.mxu0 0.0
        %448 = vmatpush.msra.mxu0 0.0
        %449 = vmatpush.msra.mxu0 0.0
        %450 = vmatpush.msra.mxu0 %v431
        %451 = vmatpush.msra.mxu0 %v363
        %452 = vmatmul.f32.gmra.mxu0 %v407
        %v453 = vpop.f32.mrf.mxu0
        %v454 = vadd.f32 %v368, %v453
        %455 = vmatmul.f32.gmra.mxu0 %v410
        %v456 = vpop.f32.mrf.mxu0
        %v457 = vadd.f32 %v373, %v456
        %458 = vmatmul.f32.gmra.mxu0 %v413
        %v459 = vpop.f32.mrf.mxu0
        %v460 = vadd.f32 %v378, %v459
        %461 = vmatmul.f32.gmra.mxu0 %v416
        %v462 = vpop.f32.mrf.mxu0
        %v463 = vadd.f32 %v383, %v462
        %464 = vmatmul.f32.gmra.mxu0 %v419
        %v465 = vpop.f32.mrf.mxu0
        %v466 = vadd.f32 %v388, %v465
        %467 = vmatmul.f32.gmra.mxu0 %v422
        %v468 = vpop.f32.mrf.mxu0
        %v469 = vadd.f32 %v393, %v468
        %470 = vmatmul.f32.gmra.mxu0 %v425
        %v471 = vpop.f32.mrf.mxu0
        %v472 = vadd.f32 %v398, %v471
        %473 = vmatmul.f32.gmra.mxu0 %v428
        %v474 = vpop.f32.mrf.mxu0
        %v475 = vadd.f32 %v403, %v474
        %476 = vdwg.mxu0
        %477 = vmatpush.msra.mxu0 0.0
        %478 = vmatpush.msra.mxu0 0.0
        %479 = vmatpush.msra.mxu0 0.0
        %480 = vmatpush.msra.mxu0 0.0
        %481 = vmatpush.msra.mxu0 0.0
        %482 = vmatpush.msra.mxu0 0.0
        %483 = vmatpush.msra.mxu0 0.0
        %484 = vmatpush.msra.mxu0 0.0
        %485 = vmatpush.msra.mxu0 0.0
        %486 = vmatpush.msra.mxu0 0.0
        %487 = vmatpush.msra.mxu0 0.0
        %488 = vmatpush.msra.mxu0 0.0
        %489 = vmatpush.msra.mxu0 0.0
        %490 = vmatpush.msra.mxu0 0.0
        %491 = vmatpush.msra.mxu0 %v434
        %492 = vmatpush.msra.mxu0 %v364
        %493 = vmatmul.f32.gmra.mxu0 %v407
        %v494 = vpop.f32.mrf.mxu0
        %v495 = vadd.f32 %v368, %v494
        %496 = vmatmul.f32.gmra.mxu0 %v410
        %v497 = vpop.f32.mrf.mxu0
        %v498 = vadd.f32 %v373, %v497
        %499 = vmatmul.f32.gmra.mxu0 %v413
        %v500 = vpop.f32.mrf.mxu0
        %v501 = vadd.f32 %v378, %v500
        %502 = vmatmul.f32.gmra.mxu0 %v416
        %v503 = vpop.f32.mrf.mxu0
        %v504 = vadd.f32 %v383, %v503
        %505 = vmatmul.f32.gmra.mxu0 %v419
        %v506 = vpop.f32.mrf.mxu0
        %v507 = vadd.f32 %v388, %v506
        %508 = vmatmul.f32.gmra.mxu0 %v422
        %v509 = vpop.f32.mrf.mxu0
        %v510 = vadd.f32 %v393, %v509
        %511 = vmatmul.f32.gmra.mxu0 %v425
        %v512 = vpop.f32.mrf.mxu0
        %v513 = vadd.f32 %v398, %v512
        %514 = vmatmul.f32.gmra.mxu0 %v428
        %v515 = vpop.f32.mrf.mxu0
        %v516 = vadd.f32 %v403, %v515
        %517 = vdwg.mxu0
        %v518 = vmax.f32 %v454, 0.0
        %v519 = vmax.f32 %v495, 0.0
        %v520 = vmax.f32 %v457, 0.0
        %v521 = vmax.f32 %v498, 0.0
        %v522 = vmax.f32 %v460, 0.0
        %v523 = vmax.f32 %v501, 0.0
        %v524 = vmax.f32 %v463, 0.0
        %v525 = vmax.f32 %v504, 0.0
        %v526 = vmax.f32 %v466, 0.0
        %v527 = vmax.f32 %v507, 0.0
        %v528 = vmax.f32 %v469, 0.0
        %v529 = vmax.f32 %v510, 0.0
        %v530 = vmax.f32 %v472, 0.0
        %v531 = vmax.f32 %v513, 0.0
        %v532 = vmax.f32 %v475, 0.0
        %v533 = vmax.f32 %v516, 0.0
        %534 = vst [vmem:[%s161] sm:$0xff] %v518
        %535 = vst [vmem:[%s161 + $0x8] sm:$0xff] %v519
        %536 = vst [vmem:[%s161 + $0x10] sm:$0xff] %v520
        %537 = vst [vmem:[%s161 + $0x18] sm:$0xff] %v521
        %538 = vst [vmem:[%s161 + $0x20] sm:$0xff] %v522
        %539 = vst [vmem:[%s161 + $0x28] sm:$0xff] %v523
        %540 = vst [vmem:[%s161 + $0x30] sm:$0xff] %v524
        %541 = vst [vmem:[%s161 + $0x38] sm:$0xff] %v525
        %542 = vst [vmem:[%s161 + $0x40] sm:$0xff] %v526
        %543 = vst [vmem:[%s161 + $0x48] sm:$0xff] %v527
        %544 = vst [vmem:[%s161 + $0x50] sm:$0xff] %v528
        %545 = vst [vmem:[%s161 + $0x58] sm:$0xff] %v529
        %546 = vst [vmem:[%s161 + $0x60] sm:$0xff] %v530
        %547 = vst [vmem:[%s161 + $0x68] sm:$0xff] %v531
        %548 = vst [vmem:[%s161 + $0x70] sm:$0xff] %v532
        %549 = vst [vmem:[%s161 + $0x78] sm:$0xff] %v533
        %s550 = sand.u32 %s93, 1
        %s551 = scalar_lea.sflag [#allocation3], %s550
        %s552 = sand.u32 %s93, 1
        %s553 = smul.addr %s552, 128
        %s554 = scalar_lea.vmem [#allocation2], %s553
        // Predicated region
        $region33: #{tpu_custom_call.1} parent=31 // pred_check
          %p555 = pneg %p103
        $region34: #{tpu_custom_call.1} parent=31 // pred_check_branch
          %557 = sbr.rel (%p555) target = $region36
        $region35: #{tpu_custom_call.1} parent=31 // pred_region
          %559 = vsyncadd %s551, 0
          %s560 = smul.addr %s17, 16
          %s561 = smul.addr %s560, 8
          %s562 = scalar_lea.hbm %s3, %s561
          %s563 = sshll.u32 %s554, 4
          %s564 = int_to_ptr.vmem [resolvable:$true] %s563
          %s565 = sshll.u32 %s562, 4
          %s566 = int_to_ptr.hbm [resolvable:$true] %s565
          %571 = dma.vmem_to_hbm [thread:$0]  %s564, 2048, %s566, %s551, 256, 256, 16
        $region36: #{tpu_custom_call.1} parent=31 // pred_fallthru
          _
      $region32: #{tpu_custom_call.1} parent=5 // pred_fallthru
        _
      %p572 = scmp.le.s32.totalorder 2, %s12
      // Predicated region
      $region37: #{tpu_custom_call.1} parent=5 // pred_check
        %p573 = pneg %p572
      $region38: #{tpu_custom_call.1} parent=5 // pred_check_branch
        %575 = sbr.rel (%p573) target = $region40
      $region39: #{tpu_custom_call.1} parent=5 // pred_region
        %s576 = ssub.s32 %s12, 2
        // Predicated region
        $region41: #{tpu_custom_call.1} parent=39 // pred_check
          %p577 = pneg %p109
        $region42: #{tpu_custom_call.1} parent=39 // pred_check_branch
          %579 = sbr.rel (%p577) target = $region44
        $region43: #{tpu_custom_call.1} parent=39 // pred_region
          %s580 = sand.u32 %s94, 1
          %s581 = scalar_lea.sflag [#allocation3], %s580
          %s582 = sand.u32 %s94, 1
          %s583 = smul.addr %s582, 128
          %s584 = scalar_lea.vmem [#allocation2], %s583
          %586 = dma.done %s581, 2048
        $region44: #{tpu_custom_call.1} parent=39 // pred_fallthru
          _
      $region40: #{tpu_custom_call.1} parent=5 // pred_fallthru
        _
    $region6: #{tpu_custom_call.1} parent=1 // loop_footer
      %s16 = sadd.s32 1, %s12
    $region7: #{tpu_custom_call.1} parent=1 // loop_footer_branch
      %11 = sbr.rel target = $region3
    $region8: #{tpu_custom_call.1} parent=1 // loop_exit
      _
    %587 = vsyncpa [#allocation3], 1
    %s588 = scalar_lea.sflag [#allocation3], 1
    %589 = vsyncpa %s588, 1

</llo_original>
